<compile_context>
chip_gen: v6e
topology: v6e:2x2x1
jax: 0.10.0
libtpu: 0.0.40
codegen_flags: <defaults>
</compile_context>

<pallas_src>
import jax
import jax.numpy as jnp
from jax.experimental import pallas as pl
from jax.experimental.pallas import tpu as pltpu


def _disc_kernel(x_ref, w1_ref, b1_ref, w2_ref, b2_ref, w3_ref, b3_ref, o_ref):
    # Layer 1: bf16 inputs, f32 accumulation on the MXU.
    h1 = jnp.dot(x_ref[...], w1_ref[...], preferred_element_type=jnp.float32)
    h1 = jnp.maximum(h1 + b1_ref[...], 0.0)                      # ReLU (f32, VPU)

    # Layer 2: tiny 64->16 matmul, f32.
    h2 = jnp.dot(h1, w2_ref[...], preferred_element_type=jnp.float32)
    h2 = jnp.maximum(h2 + b2_ref[...], 0.0)                      # ReLU

    # Layer 3: 16->1 projection as VPU multiply + lane reduce (skip the MXU entirely).
    logits = jnp.sum(h2 * w3_ref[...], axis=-1, keepdims=True) + b3_ref[...]

    o_ref[...] = jax.nn.sigmoid(logits).astype(o_ref.dtype)      # Sigmoid (EUP/VPU)


def _choose_tile_b(batch, in_features):
    """Pick a batch tile: big enough to feed the MXU, small enough for double-buffered VMEM."""
    # Target ~2 MiB per bf16 x tile (x2 for double buffering) -> well under 32 MiB scoped
    # VMEM on v7x/v6e; cap at 1024 rows, floor at 128 for MXU occupancy.
    target_bytes = 2 * 1024 * 1024
    tile = target_bytes // max(1, in_features * 2)               # bf16 = 2 bytes/elem
    tile = max(128, min(1024, tile))
    tile = (tile // 16) * 16                                     # bf16 sublane packing
    if batch <= tile:
        return batch                                             # single full block
    return tile


def discriminator_forward(x, params):
    """x: (batch, 2**input_size) float32. Returns (batch, 1) float32."""
    w1, b1, w2, b2, w3, b3 = params
    batch, in_f = x.shape
    hid1 = w1.shape[1]                                           # 64
    hid2 = w2.shape[1]                                           # 16

    tile_b = _choose_tile_b(batch, in_f)
    grid = (pl.cdiv(batch, tile_b),)

    # bf16 feed for the bandwidth-dominant first matmul; everything else stays f32.
    x_bf = x.astype(jnp.bfloat16)
    w1_bf = w1.astype(jnp.bfloat16)
    w3_row = w3.reshape(1, hid2)                                 # (16,1) -> (1,16) row

    weight_bytes = (w1_bf.size * 2 + b1.size * 4 + w2.size * 4 + b2.size * 4
                    + w3_row.size * 4 + b3.size * 4)
    cost = pl.CostEstimate(
        flops=2 * batch * (in_f * hid1 + hid1 * hid2 + hid2),
        transcendentals=batch,                                   # sigmoid exp per row
        bytes_accessed=batch * in_f * 2 + weight_bytes + batch * 4,
    )

    in_specs = [
        pl.BlockSpec((tile_b, in_f), lambda i: (i, 0)),          # x tile (streamed)
        pl.BlockSpec((in_f, hid1), lambda i: (0, 0)),            # w1 (VMEM-resident)
        pl.BlockSpec((1, hid1), lambda i: (0, 0)),               # b1
        pl.BlockSpec((hid1, hid2), lambda i: (0, 0)),            # w2
        pl.BlockSpec((1, hid2), lambda i: (0, 0)),               # b2
        pl.BlockSpec((1, hid2), lambda i: (0, 0)),               # w3 as a row
        pl.BlockSpec((1, 1), lambda i: (0, 0)),                  # b3
    ]
    out_specs = pl.BlockSpec((tile_b, 1), lambda i: (i, 0))

    return pl.pallas_call(
        _disc_kernel,
        out_shape=jax.ShapeDtypeStruct((batch, 1), jnp.float32),
        grid=grid,
        in_specs=in_specs,
        out_specs=out_specs,
        compiler_params=pltpu.CompilerParams(
            dimension_semantics=("parallel",),                   # v7x megacore sharding
        ),
        cost_estimate=cost,
    )(x_bf, w1_bf, b1, w2, b2, w3_row, b3)


def init_params(key, input_size):
    """Deterministic init mimicking PyTorch nn.Linear default (U(-1/sqrt(fan_in), ...))."""
    in_f = 2 ** input_size
    dims = [(in_f, 64), (64, 16), (16, 1)]
    params = []
    for (fan_in, fan_out) in dims:
        key, kw, kb = jax.random.split(key, 3)
        bound = 1.0 / jnp.sqrt(fan_in)
        w = jax.random.uniform(kw, (fan_in, fan_out), jnp.float32, -bound, bound)
        b = jax.random.uniform(kb, (1, fan_out), jnp.float32, -bound, bound)
        params.extend([w, b])
    return tuple(params)


def reference_forward(x, params):
    """Pure-JAX reference matching the kernel's dtype flow (bf16 layer-1, f32 elsewhere)."""
    w1, b1, w2, b2, w3, b3 = params
    h1 = jnp.dot(x.astype(jnp.bfloat16), w1.astype(jnp.bfloat16),
                 preferred_element_type=jnp.float32)
    h1 = jnp.maximum(h1 + b1, 0.0)
    h2 = jnp.maximum(jnp.dot(h1, w2, preferred_element_type=jnp.float32) + b2, 0.0)
    return jax.nn.sigmoid(jnp.dot(h2, w3, preferred_element_type=jnp.float32) + b3)


if __name__ == "__main__":
    input_size = 5          # 2**5 = 32 input features
    batch = 8

    key = jax.random.PRNGKey(0)
    key, kx = jax.random.split(key)
    x = jax.random.normal(kx, (batch, 2 ** input_size), jnp.float32)
    params = init_params(key, input_size)

    out = jax.block_until_ready(discriminator_forward(x, params))
    ref = reference_forward(x, params)

    assert out.shape == (batch, 1)
    assert bool(jnp.all(jnp.isfinite(out)))
    assert jnp.allclose(out, ref, atol=2e-3, rtol=2e-3)

    print("KERNEL_OK")
</pallas_src>

<mosaic_0001>
module attributes {stable_mosaic.version = 11 : i64} {
  func.func @_disc_kernel(%arg0: i32, %arg1: memref<8x32xbf16, #tpu.memory_space<vmem>>, %arg2: memref<32x64xbf16, #tpu.memory_space<vmem>>, %arg3: memref<1x64xf32, #tpu.memory_space<vmem>>, %arg4: memref<64x16xf32, #tpu.memory_space<vmem>>, %arg5: memref<1x16xf32, #tpu.memory_space<vmem>>, %arg6: memref<1x16xf32, #tpu.memory_space<vmem>>, %arg7: memref<1x1xf32, #tpu.memory_space<vmem>>, %arg8: memref<8x1xf32, #tpu.memory_space<vmem>>) attributes {dimension_semantics = [#tpu.dimension_semantics<parallel>], iteration_bounds = array<i64: 1>, scalar_prefetch = 0 : i64, scratch_operands = 0 : i64, tpu.core_type = #tpu.core_type<tc>, window_params = [{transform_indices = @transform_0, window_bounds = array<i64: 8, 32>}, {pipeline_mode = #tpu.pipeline_mode<synchronous>, transform_indices = @transform_1, window_bounds = array<i64: 32, 64>}, {pipeline_mode = #tpu.pipeline_mode<synchronous>, transform_indices = @transform_2, window_bounds = array<i64: 1, 64>}, {pipeline_mode = #tpu.pipeline_mode<synchronous>, transform_indices = @transform_3, window_bounds = array<i64: 64, 16>}, {pipeline_mode = #tpu.pipeline_mode<synchronous>, transform_indices = @transform_4, window_bounds = array<i64: 1, 16>}, {pipeline_mode = #tpu.pipeline_mode<synchronous>, transform_indices = @transform_5, window_bounds = array<i64: 1, 16>}, {pipeline_mode = #tpu.pipeline_mode<synchronous>, transform_indices = @transform_6, window_bounds = array<i64: 1, 1>}, {transform_indices = @transform_7, window_bounds = array<i64: 8, 1>}]} {
    %c0 = arith.constant 0 : index
    %c0_0 = arith.constant 0 : index
    %0 = vector.load %arg1[%c0, %c0_0] : memref<8x32xbf16, #tpu.memory_space<vmem>>, vector<8x32xbf16>
    %c0_1 = arith.constant 0 : index
    %c0_2 = arith.constant 0 : index
    %1 = vector.load %arg2[%c0_1, %c0_2] : memref<32x64xbf16, #tpu.memory_space<vmem>>, vector<32x64xbf16>
    %cst = arith.constant dense<0.000000e+00> : vector<8x64xf32>
    %2 = tpu.matmul %0, %1, %cst {dimension_numbers = #tpu.dot_dimension_numbers<[1], [0], [0], [1], [0, 0, 1, 1], [], []>} : vector<8x32xbf16>, vector<32x64xbf16>, vector<8x64xf32> -> vector<8x64xf32>
    %c0_3 = arith.constant 0 : index
    %c0_4 = arith.constant 0 : index
    %3 = vector.load %arg3[%c0_3, %c0_4] : memref<1x64xf32, #tpu.memory_space<vmem>>, vector<1x64xf32>
    %4 = vector.broadcast %3 : vector<1x64xf32> to vector<8x64xf32>
    %5 = arith.addf %2, %4 : vector<8x64xf32>
    %cst_5 = arith.constant 0.000000e+00 : f32
    %6 = vector.broadcast %cst_5 : f32 to vector<8x64xf32>
    %7 = arith.maximumf %5, %6 : vector<8x64xf32>
    %c0_6 = arith.constant 0 : index
    %c0_7 = arith.constant 0 : index
    %8 = vector.load %arg4[%c0_6, %c0_7] : memref<64x16xf32, #tpu.memory_space<vmem>>, vector<64x16xf32>
    %cst_8 = arith.constant dense<0.000000e+00> : vector<8x16xf32>
    %9 = tpu.matmul %7, %8, %cst_8 {dimension_numbers = #tpu.dot_dimension_numbers<[1], [0], [0], [1], [0, 0, 1, 1], [], []>} : vector<8x64xf32>, vector<64x16xf32>, vector<8x16xf32> -> vector<8x16xf32>
    %c0_9 = arith.constant 0 : index
    %c0_10 = arith.constant 0 : index
    %10 = vector.load %arg5[%c0_9, %c0_10] : memref<1x16xf32, #tpu.memory_space<vmem>>, vector<1x16xf32>
    %11 = vector.broadcast %10 : vector<1x16xf32> to vector<8x16xf32>
    %12 = arith.addf %9, %11 : vector<8x16xf32>
    %cst_11 = arith.constant 0.000000e+00 : f32
    %13 = vector.broadcast %cst_11 : f32 to vector<8x16xf32>
    %14 = arith.maximumf %12, %13 : vector<8x16xf32>
    %c0_12 = arith.constant 0 : index
    %c0_13 = arith.constant 0 : index
    %15 = vector.load %arg6[%c0_12, %c0_13] : memref<1x16xf32, #tpu.memory_space<vmem>>, vector<1x16xf32>
    %16 = vector.broadcast %15 : vector<1x16xf32> to vector<8x16xf32>
    %17 = arith.mulf %14, %16 : vector<8x16xf32>
    %cst_14 = arith.constant dense<0.000000e+00> : vector<8xf32>
    %18 = vector.multi_reduction <add>, %17, %cst_14 [1] : vector<8x16xf32> to vector<8xf32>
    %19 = vector.shape_cast %18 : vector<8xf32> to vector<8x1xf32>
    %c0_15 = arith.constant 0 : index
    %c0_16 = arith.constant 0 : index
    %20 = vector.load %arg7[%c0_15, %c0_16] : memref<1x1xf32, #tpu.memory_space<vmem>>, vector<1x1xf32>
    %21 = vector.broadcast %20 : vector<1x1xf32> to vector<8x1xf32>
    %22 = arith.addf %19, %21 : vector<8x1xf32>
    %23 = arith.negf %22 : vector<8x1xf32>
    %24 = math.exp %23 : vector<8x1xf32>
    %cst_17 = arith.constant 1.000000e+00 : f32
    %25 = vector.broadcast %cst_17 : f32 to vector<8x1xf32>
    %26 = arith.addf %25, %24 : vector<8x1xf32>
    %27 = arith.divf %25, %26 : vector<8x1xf32>
    %c0_18 = arith.constant 0 : index
    %c0_19 = arith.constant 0 : index
    %28 = vector.load %arg8[%c0_18, %c0_19] : memref<8x1xf32, #tpu.memory_space<vmem>>, vector<8x1xf32>
    tpu.vector_store %arg8[%c0_18, %c0_19], %27 {strides = array<i32>} : memref<8x1xf32, #tpu.memory_space<vmem>>, vector<8x1xf32>,
    return
  }
  func.func @transform_0(%arg0: i32) -> (i32, i32) {
    %c0_i32 = arith.constant 0 : i32
    %c0_i32_0 = arith.constant 0 : i32
    return %arg0, %c0_i32 : i32, i32
  }
  func.func @transform_1(%arg0: i32) -> (i32, i32) {
    %c0_i32 = arith.constant 0 : i32
    %c0_i32_0 = arith.constant 0 : i32
    %c0_i32_1 = arith.constant 0 : i32
    return %c0_i32, %c0_i32_0 : i32, i32
  }
  func.func @transform_2(%arg0: i32) -> (i32, i32) {
    %c0_i32 = arith.constant 0 : i32
    %c0_i32_0 = arith.constant 0 : i32
    %c0_i32_1 = arith.constant 0 : i32
    return %c0_i32, %c0_i32_0 : i32, i32
  }
  func.func @transform_3(%arg0: i32) -> (i32, i32) {
    %c0_i32 = arith.constant 0 : i32
    %c0_i32_0 = arith.constant 0 : i32
    %c0_i32_1 = arith.constant 0 : i32
    return %c0_i32, %c0_i32_0 : i32, i32
  }
  func.func @transform_4(%arg0: i32) -> (i32, i32) {
    %c0_i32 = arith.constant 0 : i32
    %c0_i32_0 = arith.constant 0 : i32
    %c0_i32_1 = arith.constant 0 : i32
    return %c0_i32, %c0_i32_0 : i32, i32
  }
  func.func @transform_5(%arg0: i32) -> (i32, i32) {
    %c0_i32 = arith.constant 0 : i32
    %c0_i32_0 = arith.constant 0 : i32
    %c0_i32_1 = arith.constant 0 : i32
    return %c0_i32, %c0_i32_0 : i32, i32
  }
  func.func @transform_6(%arg0: i32) -> (i32, i32) {
    %c0_i32 = arith.constant 0 : i32
    %c0_i32_0 = arith.constant 0 : i32
    %c0_i32_1 = arith.constant 0 : i32
    return %c0_i32, %c0_i32_0 : i32, i32
  }
  func.func @transform_7(%arg0: i32) -> (i32, i32) {
    %c0_i32 = arith.constant 0 : i32
    %c0_i32_0 = arith.constant 0 : i32
    return %arg0, %c0_i32 : i32, i32
  }
}

</mosaic_0001>

<llo_original>
// kernel: tpu_custom_call.1
$region0: #{tpu_custom_call.1}
  #allocation0 [shape = 'u32[]', space=smem, size = 0x4, offset = 0x4, fixed_abs, tag = 'smem constant byte address 0x4 - core index']
  #allocation1 [shape = 'u32[144,128]{1,0:T(1,128)}', space=vmem, size = 0x12000, scoped, tag = 'internal scratch']
  #allocation2 [shape = 'f32[1,1]{1,0:T(1,128)S(1)}', space=vmem, size = 0x200, scoped, tag = 'scoped memory for tpu_custom_call.1']
  %s0 = inlined_call_operand.vmem [shape: bf16[8,32], index: 0, kind: input, shape index: {}]
  %s1 = inlined_call_operand.vmem [shape: bf16[32,64], index: 1, kind: input, shape index: {}]
  %s2 = inlined_call_operand.vmem [shape: f32[1,64], index: 2, kind: input, shape index: {}]
  %s3 = inlined_call_operand.vmem [shape: f32[64,16], index: 3, kind: input, shape index: {}]
  %s4 = inlined_call_operand.vmem [shape: f32[1,16], index: 4, kind: input, shape index: {}]
  %s5 = inlined_call_operand.vmem [shape: f32[1,16], index: 5, kind: input, shape index: {}]
  %s6 = inlined_call_operand.<no memory space> [shape: f32[1,1], index: 6, kind: input, shape index: {}]
  %s7 = inlined_call_operand.vmem [shape: f32[8,1], index: 7, kind: output, shape index: {}]
  %s8 = sld [smem:[#allocation0]]
  $region38: #{tpu_custom_call.1} parent=0
    _
  %s10 = ssub.s32 1, %s8
  %s11 = scalar_select 0, %s10, %s8
  %v12 = vstv %s6
  %13 = vst [vmem:[#allocation2] sm:$0x1] %v12
  // Predicated region
  $region2: #{tpu_custom_call.1} parent=0 // pred_check
    _
  $region3: #{tpu_custom_call.1} parent=0 // pred_check_branch
    %15 = sbr.rel (0) target = $region5
  $region4: #{tpu_custom_call.1} parent=0 // pred_region
    _
  $region5: #{tpu_custom_call.1} parent=0 // pred_fallthru
    _
  // Predicated region
  $region6: #{tpu_custom_call.1} parent=0 // pred_check
    _
  $region7: #{tpu_custom_call.1} parent=0 // pred_check_branch
    %17 = sbr.rel (0) target = $region9
  $region8: #{tpu_custom_call.1} parent=0 // pred_region
    _
  $region9: #{tpu_custom_call.1} parent=0 // pred_fallthru
    _
  // Predicated region
  $region10: #{tpu_custom_call.1} parent=0 // pred_check
    _
  $region11: #{tpu_custom_call.1} parent=0 // pred_check_branch
    %19 = sbr.rel (0) target = $region13
  $region12: #{tpu_custom_call.1} parent=0 // pred_region
    _
  $region13: #{tpu_custom_call.1} parent=0 // pred_fallthru
    _
  // Predicated region
  $region14: #{tpu_custom_call.1} parent=0 // pred_check
    _
  $region15: #{tpu_custom_call.1} parent=0 // pred_check_branch
    %21 = sbr.rel (0) target = $region17
  $region16: #{tpu_custom_call.1} parent=0 // pred_region
    _
  $region17: #{tpu_custom_call.1} parent=0 // pred_fallthru
    _
  // Predicated region
  $region18: #{tpu_custom_call.1} parent=0 // pred_check
    _
  $region19: #{tpu_custom_call.1} parent=0 // pred_check_branch
    %23 = sbr.rel (0) target = $region21
  $region20: #{tpu_custom_call.1} parent=0 // pred_region
    _
  $region21: #{tpu_custom_call.1} parent=0 // pred_fallthru
    _
  // Predicated region
  $region22: #{tpu_custom_call.1} parent=0 // pred_check
    _
  $region23: #{tpu_custom_call.1} parent=0 // pred_check_branch
    %25 = sbr.rel (0) target = $region25
  $region24: #{tpu_custom_call.1} parent=0 // pred_region
    _
  $region25: #{tpu_custom_call.1} parent=0 // pred_fallthru
    _
  // Predicated region
  $region26: #{tpu_custom_call.1} parent=0 // pred_check
    _
  $region27: #{tpu_custom_call.1} parent=0 // pred_check_branch
    %27 = sbr.rel (0) target = $region29
  $region28: #{tpu_custom_call.1} parent=0 // pred_region
    _
  $region29: #{tpu_custom_call.1} parent=0 // pred_fallthru
    _
  %v29 = vld [vmem:[%s0] sm:$0xf]
  %v30 = vld [vmem:[%s1] sm:$0xf]
  %v31 = vld [vmem:[%s1 + $0x4] sm:$0xf]
  %v32 = vld [vmem:[%s1 + $0x8] sm:$0xf]
  %v33 = vld [vmem:[%s1 + $0xc] sm:$0xf]
  %v34 = vld [vmem:[%s2] sm:$0x1]
  %v36 = vlaneseq
  %v37 = vshrl.u32 %v36, 7
  %v38 = vsub.s32 0, %v37
  %v39 = vrot.slane %v34, %v38
  %v45 = vunpack.c.l.b16 %v30
  %v46 = vunpack.c.l.b16 %v31
  %v47 = vunpack.c.l.b16 %v32
  %v48 = vunpack.c.l.b16 %v33
  %v49 = vpack.c.b16 %v46, %v45
  %v50 = vpack.c.b16 %v48, %v47
  %vm53 = vcmask 261120
  %v55 = vsel %vm53, %v29, 0
  %57 = vmatprep.subr.bf16.mxu0 0
  %58 = vmatpush1.bf16.msra.mxu0 0
  %59 = vmatprep.subr.bf16.mxu0 0
  %60 = vmatpush1.bf16.msra.mxu0 0
  %61 = vmatprep.subr.bf16.mxu0 0
  %62 = vmatpush1.bf16.msra.mxu0 0
  %63 = vmatprep.subr.bf16.mxu0 0
  %64 = vmatpush1.bf16.msra.mxu0 0
  %65 = vmatprep.subr.bf16.mxu0 0
  %66 = vmatpush1.bf16.msra.mxu0 0
  %67 = vmatprep.subr.bf16.mxu0 0
  %68 = vmatpush1.bf16.msra.mxu0 0
  %69 = vmatprep.subr.bf16.mxu0 0
  %70 = vmatpush1.bf16.msra.mxu0 %v50
  %71 = vmatprep.subr.bf16.mxu0 0
  %72 = vmatpush1.bf16.msra.mxu0 %v49
  %73 = vmatprep.subr.bf16.mxu0 0
  %74 = vmatpush2.bf16.msra.mxu0 0
  %75 = vmatprep.subr.bf16.mxu0 0
  %76 = vmatpush2.bf16.msra.mxu0 0
  %77 = vmatprep.subr.bf16.mxu0 0
  %78 = vmatpush2.bf16.msra.mxu0 0
  %79 = vmatprep.subr.bf16.mxu0 0
  %80 = vmatpush2.bf16.msra.mxu0 0
  %81 = vmatprep.subr.bf16.mxu0 0
  %82 = vmatpush2.bf16.msra.mxu0 0
  %83 = vmatprep.subr.bf16.mxu0 0
  %84 = vmatpush2.bf16.msra.mxu0 0
  %85 = vmatprep.subr.bf16.mxu0 0
  %86 = vmatpush2.bf16.msra.mxu0 0
  %87 = vmatprep.subr.bf16.mxu0 0
  %88 = vmatpush2.bf16.msra.mxu0 0
  %89 = vmatprep.mubr.bf16.mxu0 0
  %90 = vmatmul.mubr.bf16.gmra.mxu0 %v55
  %v91 = vpop.f32.mrf.mxu0
  %v92 = vadd.f32 %v39, %v91
  %v93 = vpop.f32.mrf.mxu0
  %v94 = vpop.f32.mrf.mxu0
  %v95 = vpop.f32.mrf.mxu0
  %96 = vdwg.mxu0
  %v97 = vmax.f32 %v92, 0.0
  %v98 = vld [vmem:[%s3] sm:$0xff]
  %v99 = vld [vmem:[%s3 + $0x8] sm:$0xff]
  %v100 = vld [vmem:[%s3 + $0x10] sm:$0xff]
  %v101 = vld [vmem:[%s3 + $0x18] sm:$0xff]
  %v102 = vld [vmem:[%s3 + $0x20] sm:$0xff]
  %v103 = vld [vmem:[%s3 + $0x28] sm:$0xff]
  %v104 = vld [vmem:[%s3 + $0x30] sm:$0xff]
  %v105 = vld [vmem:[%s3 + $0x38] sm:$0xff]
  %v106 = vld [vmem:[%s4] sm:$0x1]
  %v108 = vlaneseq
  %v109 = vshrl.u32 %v108, 7
  %v110 = vsub.s32 0, %v109
  %v111 = vrot.slane %v106, %v110
  %vm113 = vcmask 523264
  %v115 = vsel %vm113, %v97, 0
  %117 = vmatprep.subr.mxu0 0.0
  %118 = vmatpush1.msra.mxu0 0.0
  %119 = vmatprep.subr.mxu0 0.0
  %120 = vmatpush1.msra.mxu0 0.0
  %121 = vmatprep.subr.mxu0 0.0
  %122 = vmatpush1.msra.mxu0 0.0
  %123 = vmatprep.subr.mxu0 0.0
  %124 = vmatpush1.msra.mxu0 0.0
  %125 = vmatprep.subr.mxu0 0.0
  %126 = vmatpush1.msra.mxu0 0.0
  %127 = vmatprep.subr.mxu0 0.0
  %128 = vmatpush1.msra.mxu0 0.0
  %129 = vmatprep.subr.mxu0 0.0
  %130 = vmatpush1.msra.mxu0 0.0
  %131 = vmatprep.subr.mxu0 0.0
  %132 = vmatpush1.msra.mxu0 0.0
  %133 = vmatprep.subr.mxu0 0.0
  %134 = vmatpush1.msra.mxu0 %v105
  %135 = vmatprep.subr.mxu0 0.0
  %136 = vmatpush1.msra.mxu0 %v104
  %137 = vmatprep.subr.mxu0 0.0
  %138 = vmatpush1.msra.mxu0 %v103
  %139 = vmatprep.subr.mxu0 0.0
  %140 = vmatpush1.msra.mxu0 %v102
  %141 = vmatprep.subr.mxu0 0.0
  %142 = vmatpush1.msra.mxu0 %v101
  %143 = vmatprep.subr.mxu0 0.0
  %144 = vmatpush1.msra.mxu0 %v100
  %145 = vmatprep.subr.mxu0 0.0
  %146 = vmatpush1.msra.mxu0 %v99
  %147 = vmatprep.subr.mxu0 0.0
  %148 = vmatpush1.msra.mxu0 %v98
  %149 = vmatprep.subr.mxu0 0.0
  %150 = vmatpush2.msra.mxu0 0.0
  %151 = vmatprep.subr.mxu0 0.0
  %152 = vmatpush2.msra.mxu0 0.0
  %153 = vmatprep.subr.mxu0 0.0
  %154 = vmatpush2.msra.mxu0 0.0
  %155 = vmatprep.subr.mxu0 0.0
  %156 = vmatpush2.msra.mxu0 0.0
  %157 = vmatprep.subr.mxu0 0.0
  %158 = vmatpush2.msra.mxu0 0.0
  %159 = vmatprep.subr.mxu0 0.0
  %160 = vmatpush2.msra.mxu0 0.0
  %161 = vmatprep.subr.mxu0 0.0
  %162 = vmatpush2.msra.mxu0 0.0
  %163 = vmatprep.subr.mxu0 0.0
  %164 = vmatpush2.msra.mxu0 0.0
  %165 = vmatprep.subr.mxu0 0.0
  %166 = vmatpush2.msra.mxu0 0.0
  %167 = vmatprep.subr.mxu0 0.0
  %168 = vmatpush2.msra.mxu0 0.0
  %169 = vmatprep.subr.mxu0 0.0
  %170 = vmatpush2.msra.mxu0 0.0
  %171 = vmatprep.subr.mxu0 0.0
  %172 = vmatpush2.msra.mxu0 0.0
  %173 = vmatprep.subr.mxu0 0.0
  %174 = vmatpush2.msra.mxu0 0.0
  %175 = vmatprep.subr.mxu0 0.0
  %176 = vmatpush2.msra.mxu0 0.0
  %177 = vmatprep.subr.mxu0 0.0
  %178 = vmatpush2.msra.mxu0 0.0
  %179 = vmatprep.subr.mxu0 0.0
  %180 = vmatpush2.msra.mxu0 0.0
  %181 = vmatprep.mubr.f32.mxu0 0.0
  %182 = vmatmul.mubr.f32.gmra.mxu0 %v115
  %v183 = vpop.f32.mrf.mxu0
  %v184 = vadd.f32 %v111, %v183
  %v185 = vpop.f32.mrf.mxu0
  %186 = vdwg.mxu0
  %v187 = vmax.f32 %v184, 0.0
  %v188 = vld [vmem:[%s5] sm:$0x1]
  %v190 = vlaneseq
  %v191 = vshrl.u32 %v190, 7
  %v192 = vsub.s32 0, %v191
  %v193 = vrot.slane %v188, %v192
  %v195 = vmul.f32 %v187, %v193
  %vm196 = vcmask 130048
  %v197 = vsel %vm196, %v195, 0.0
  %198 = vadd.xlane.f32.xlu0 %v197
  %v199 = vpop.xlane.xlu0 %198
  %v200 = vld [vmem:[#allocation2] sm:$0x1]
  %v202 = vlaneseq
  %v203 = vshrl.u32 %v202, 7
  %v204 = vsub.s32 0, %v203
  %v205 = vrot.slane %v200, %v204
  %v207 = vadd.f32 %v199, %v205
  %v208 = vxor.u32 %v207, 2147483648
  %v209 = vmul.f32 %v208, 1.442695
  %v210 = vpow.pop %v209
  %v211 = vadd.f32 %v210, 1.0
  %v212 = vrcp.pop %v211
  %v213 = vmul.f32 1.0, %v212
  %vm214 = vcmask 7168
  %215 = vst.msk [vmem:[%s7] sm:$0xff] %vm214, %v213
  // Predicated region
  $region30: #{tpu_custom_call.1} parent=0 // pred_check
    _
  $region31: #{tpu_custom_call.1} parent=0 // pred_check_branch
    %217 = sbr.rel (0) target = $region33
  $region32: #{tpu_custom_call.1} parent=0 // pred_region
    _
  $region33: #{tpu_custom_call.1} parent=0 // pred_fallthru
    _
  // Predicated region
  $region34: #{tpu_custom_call.1} parent=0 // pred_check
    _
  $region35: #{tpu_custom_call.1} parent=0 // pred_check_branch
    %219 = sbr.rel (0) target = $region37
  $region36: #{tpu_custom_call.1} parent=0 // pred_region
    _
  $region37: #{tpu_custom_call.1} parent=0 // pred_fallthru
    _

</llo_original>
